<compile_context>
chip_gen: v6e
topology: v6e:2x2x1
jax: 0.10.0
libtpu: 0.0.40
codegen_flags: <defaults>
</compile_context>

<pallas_src>
import math

import jax
import jax.numpy as jnp
from jax.experimental import pallas as pl
from jax.experimental.pallas import tpu as pltpu

_LANES = 128
_MAX_BLOCK_BYTES = 8 * 1024 * 1024      # 8 MiB/block -> 4 live copies = 32 MiB
_VMEM_LIMIT_BYTES = 40 * 1024 * 1024    # < 64 MiB (v7x) and < 128 MiB (v5e/v6e)
_HALF_LOG_2PI = 0.5 * math.log(2.0 * math.pi)
_PALLAS_MIN_ELEMS = 1 << 18             # below ~1 MiB of f32, XLA fusion wins


def _sublane_multiple(itemsize: int) -> int:
    # Min tile is (8,128) for 4-byte, (16,128) for 2-byte, (32,128) for 1-byte.
    return max(8, 32 // max(1, itemsize))


def _num_parallel_cores() -> int:
    """TensorCores a 'parallel' grid axis can shard across on this chip."""
    try:
        kind = jax.devices()[0].device_kind.lower()
    except Exception:
        return 1
    return 2 if any(t in kind for t in ("v7", "v4", "v5p")) else 1


def _choose_block_rows(rows: int, itemsize: int, num_cores: int) -> int:
    """Pick rows-per-block for a [rows, 128] slab.

    Single-TC chips: fewest, largest blocks (per-step overhead is pure tax).
    Dual-TC chips:   even number of steps so both cores stream a balanced half.
    """
    sub = _sublane_multiple(itemsize)
    max_rows = max(sub, (_MAX_BLOCK_BYTES // (_LANES * itemsize)) // sub * sub)
    if num_cores <= 1:
        block = min(rows, max_rows)
    else:
        steps = max(2, pl.cdiv(rows, max_rows))
        steps += steps % 2                      # even step count for 2 TCs
        block = pl.cdiv(rows, steps)
    block = -(-block // sub) * sub              # round up to sublane multiple
    return max(sub, min(block, max_rows, rows))


def _normal_log_prob_kernel(scalars_ref, x_ref, o_ref):
    """Elementwise Normal log-density: o = a * (x - loc)^2 + c.

    scalars_ref : SMEM f32[3] -> [loc, a = -0.5/std^2, c = -(log std + 0.5 log 2pi)]
    x_ref/o_ref : VMEM [block_rows, 128] in the caller's dtype (f32 math in-register)
    """
    loc = scalars_ref[0]
    a = scalars_ref[1]
    c = scalars_ref[2]
    x = x_ref[...].astype(jnp.float32)
    d = x - loc
    o_ref[...] = (d * d * a + c).astype(o_ref.dtype)


def _normal_log_prob_2d(x2d, scalars, block_rows):
    """x2d: [rows, 128], rows a multiple of the dtype's sublane multiple."""
    rows = x2d.shape[0]
    n = x2d.size
    itemsize = jnp.dtype(x2d.dtype).itemsize
    grid = (pl.cdiv(rows, block_rows),)
    return pl.pallas_call(
        _normal_log_prob_kernel,
        out_shape=jax.ShapeDtypeStruct(x2d.shape, x2d.dtype),
        grid_spec=pltpu.PrefetchScalarGridSpec(
            num_scalar_prefetch=0,
            grid=grid,
            in_specs=[
                pl.BlockSpec(memory_space=pltpu.MemorySpace.SMEM),
                pl.BlockSpec((block_rows, _LANES), lambda i: (i, 0)),
            ],
            out_specs=pl.BlockSpec((block_rows, _LANES), lambda i: (i, 0)),
        ),
        compiler_params=pltpu.CompilerParams(
            dimension_semantics=("parallel",),
            vmem_limit_bytes=_VMEM_LIMIT_BYTES,
        ),
        cost_estimate=pl.CostEstimate(
            flops=3 * n, bytes_accessed=2 * n * itemsize, transcendentals=0),
    )(scalars, x2d)


class PallasNormal:
    """Minimal stand-in for torch.distributions.Normal backed by Pallas."""

    def __init__(self, loc, std):
        self.loc = jnp.asarray(loc, jnp.float32)
        self.scale = jnp.asarray(std, jnp.float32)
        # Fold the per-element constants once (cached across log_prob calls).
        self._scalars = jnp.stack(
            [
                self.loc,
                -0.5 / (self.scale * self.scale),
                -(jnp.log(self.scale) + _HALF_LOG_2PI),
            ]
        ).astype(jnp.float32)

    @property
    def mean(self):
        return self.loc

    @property
    def stddev(self):
        return self.scale

    def _log_prob_jnp(self, x):
        xf = x.astype(jnp.float32)
        z = (xf - self.loc) / self.scale
        lp = -0.5 * z * z - jnp.log(self.scale) - _HALF_LOG_2PI
        return lp.astype(x.dtype)

    def log_prob(self, x, force_pallas: bool = False, block_rows=None):
        x = jnp.asarray(x)
        if not jnp.issubdtype(x.dtype, jnp.floating):
            x = x.astype(jnp.float32)
        n = x.size
        if n == 0:
            return jnp.zeros(x.shape, x.dtype)
        if not force_pallas and n < _PALLAS_MIN_ELEMS:
            # Tiny inputs: plain XLA elementwise fusion beats kernel launch cost.
            return self._log_prob_jnp(x)

        itemsize = jnp.dtype(x.dtype).itemsize
        sub = _sublane_multiple(itemsize)
        align = sub * _LANES
        n_head = n - (n % align)
        if n_head == 0:
            return self._log_prob_jnp(x)

        orig_shape = x.shape
        cores = _num_parallel_cores()

        if n_head == n:
            # Zero-copy view to a lane-dense [rows, 128] slab.
            x2d = x.reshape(n // _LANES, _LANES)
            br = block_rows or _choose_block_rows(x2d.shape[0], itemsize, cores)
            return _normal_log_prob_2d(x2d, self._scalars, br).reshape(orig_shape)

        # Unaligned: kernel streams the aligned prefix; the <1-tile ragged tail
        # is computed with jnp and stitched once (no full-array pad/slice trips).
        x_flat = x.reshape(-1)
        head = x_flat[:n_head].reshape(n_head // _LANES, _LANES)
        br = block_rows or _choose_block_rows(head.shape[0], itemsize, cores)
        out_head = _normal_log_prob_2d(head, self._scalars, br).reshape(-1)
        out_tail = self._log_prob_jnp(x_flat[n_head:])
        return jnp.concatenate([out_head, out_tail]).reshape(orig_shape)

    def sample(self, key, sample_shape=()):
        # TODO(synk): torch RNG-matched sampling has no Pallas equivalent;
        # reparameterized sampling done with jax.random here.
        eps = jax.random.normal(key, sample_shape, dtype=jnp.float32)
        return self.loc + self.scale * eps


class Prior:
    """JAX/Pallas port of the PyTorch `Prior` module."""

    def __init__(self, loc: float = 0.0, std: float = 1.0):
        # deterministic "buffers", matching torch.get_default_dtype() == f32
        self.loc = jnp.asarray(loc, jnp.float32)
        self.std = jnp.asarray(std, jnp.float32)

    def __call__(self):
        return self.forward()

    def forward(self) -> PallasNormal:
        return PallasNormal(self.loc, self.std)


if __name__ == "__main__":
    key = jax.random.PRNGKey(0)
    k1, k2, k3, k4 = jax.random.split(key, 4)

    prior = Prior(loc=0.0, std=1.0)
    dist = prior()  # forward() -> Normal(loc, std)

    def ref_log_prob(x):
        xf = jnp.asarray(x, jnp.float32)
        return (
            -0.5 * ((xf - prior.loc) / prior.std) ** 2
            - jnp.log(prior.std)
            - 0.5 * math.log(2.0 * math.pi)
        )

    # 1) Small NCHW-shaped f32 tensor (2048 elems, aligned); force the Pallas path.
    x = jax.random.normal(k1, (2, 4, 16, 16), dtype=jnp.float32)
    lp = jax.block_until_ready(dist.log_prob(x, force_pallas=True))
    assert lp.shape == x.shape and lp.dtype == jnp.float32
    assert jnp.allclose(lp, ref_log_prob(x), atol=1e-5, rtol=1e-5)

    # 2) Unaligned shape (1479 elems): aligned prefix via kernel + jnp tail stitch.
    y = jax.random.normal(k2, (3, 17, 29), dtype=jnp.float32)
    lp_y = jax.block_until_ready(dist.log_prob(y, force_pallas=True))
    assert lp_y.shape == y.shape
    assert jnp.allclose(lp_y, ref_log_prob(y), atol=1e-5, rtol=1e-5)

    # 3) Native bf16 streaming (no wrapper-side f32 upcast of the array).
    xb = jax.random.normal(k3, (4, 16, 64), dtype=jnp.bfloat16)
    lp_b = jax.block_until_ready(dist.log_prob(xb, force_pallas=True))
    assert lp_b.shape == xb.shape and lp_b.dtype == jnp.bfloat16
    assert jnp.allclose(lp_b.astype(jnp.float32), ref_log_prob(xb),
                        atol=5e-2, rtol=2e-2)

    # 4) Partial last block (rows=24, block_rows=16 -> edge block of 8 rows).
    z = jax.random.normal(k4, (3, 8, 128), dtype=jnp.float32)
    lp_z = jax.block_until_ready(dist.log_prob(z, force_pallas=True, block_rows=16))
    assert jnp.allclose(lp_z, ref_log_prob(z), atol=1e-5, rtol=1e-5)

    # 5) Default path (small-input fallback to plain jnp) stays consistent.
    lp_fb = jax.block_until_ready(dist.log_prob(x))
    assert jnp.allclose(lp_fb, ref_log_prob(x), atol=1e-5, rtol=1e-5)

    print("KERNEL_OK")
</pallas_src>

<mosaic_0001>
module attributes {stable_mosaic.version = 11 : i64} {
  func.func @_normal_log_prob_kernel(%arg0: i32, %arg1: memref<3xf32, #tpu.memory_space<smem>>, %arg2: memref<16x128xf32, #tpu.memory_space<vmem>>, %arg3: memref<16x128xf32, #tpu.memory_space<vmem>>) attributes {dimension_semantics = [#tpu.dimension_semantics<parallel>], iteration_bounds = array<i64: 1>, scalar_prefetch = 0 : i64, scratch_operands = 0 : i64, tpu.core_type = #tpu.core_type<tc>, window_params = [{transform_indices = @transform_0, window_bounds = array<i64: 3>}, {transform_indices = @transform_1, window_bounds = array<i64: 16, 128>}, {transform_indices = @transform_2, window_bounds = array<i64: 16, 128>}]} {
    %c0 = arith.constant 0 : index
    %0 = memref.load %arg1[%c0] : memref<3xf32, #tpu.memory_space<smem>>
    %c1 = arith.constant 1 : index
    %1 = memref.load %arg1[%c1] : memref<3xf32, #tpu.memory_space<smem>>
    %c2 = arith.constant 2 : index
    %2 = memref.load %arg1[%c2] : memref<3xf32, #tpu.memory_space<smem>>
    %c0_0 = arith.constant 0 : index
    %c0_1 = arith.constant 0 : index
    %3 = vector.load %arg2[%c0_0, %c0_1] : memref<16x128xf32, #tpu.memory_space<vmem>>, vector<16x128xf32>
    %4 = vector.broadcast %0 : f32 to vector<16x128xf32>
    %5 = arith.subf %3, %4 : vector<16x128xf32>
    %6 = arith.mulf %5, %5 : vector<16x128xf32>
    %7 = vector.broadcast %1 : f32 to vector<16x128xf32>
    %8 = arith.mulf %6, %7 : vector<16x128xf32>
    %9 = vector.broadcast %2 : f32 to vector<16x128xf32>
    %10 = arith.addf %8, %9 : vector<16x128xf32>
    %c0_2 = arith.constant 0 : index
    %c0_3 = arith.constant 0 : index
    %11 = vector.load %arg3[%c0_2, %c0_3] : memref<16x128xf32, #tpu.memory_space<vmem>>, vector<16x128xf32>
    tpu.vector_store %arg3[%c0_2, %c0_3], %10 {strides = array<i32>} : memref<16x128xf32, #tpu.memory_space<vmem>>, vector<16x128xf32>,
    return
  }
  func.func @transform_0(%arg0: i32) -> i32 {
    %c0_i32 = arith.constant 0 : i32
    %c0_i32_0 = arith.constant 0 : i32
    return %c0_i32 : i32
  }
  func.func @transform_1(%arg0: i32) -> (i32, i32) {
    %c0_i32 = arith.constant 0 : i32
    %c0_i32_0 = arith.constant 0 : i32
    return %arg0, %c0_i32 : i32, i32
  }
  func.func @transform_2(%arg0: i32) -> (i32, i32) {
    %c0_i32 = arith.constant 0 : i32
    %c0_i32_0 = arith.constant 0 : i32
    return %arg0, %c0_i32 : i32, i32
  }
}

</mosaic_0001>

<llo_original>
// kernel: tpu_custom_call.1
$region0: #{tpu_custom_call.1}
  #allocation0 [shape = 'u32[]', space=smem, size = 0x4, offset = 0x4, fixed_abs, tag = 'smem constant byte address 0x4 - core index']
  #allocation1 [shape = 'u32[144,128]{1,0:T(1,128)}', space=vmem, size = 0x12000, scoped, tag = 'internal scratch']
  %s0 = inlined_call_operand.hbm [shape: f32[3], index: 0, kind: input, shape index: {}]
  %s1 = inlined_call_operand.hbm [shape: f32[16,128], index: 1, kind: input, shape index: {}]
  %s2 = inlined_call_operand.hbm [shape: f32[16,128], index: 2, kind: output, shape index: {}]
  %s3 = sld [smem:[#allocation0]]
  $region26: #{tpu_custom_call.1} parent=0
    _
  %s5 = ssub.s32 1, %s3
  %s6 = scalar_select 0, %s5, %s3
  $region1: #{tpu_custom_call.1} parent=0
    #allocation2 [shape = 'u8[512]{0}', space=smem, size = 0x200, scoped, tag = 'input window, operand 0, single buffered']
    #allocation3 [shape = 's32[1]{0}', space=sflag, size = 0x4, scoped, tag = 'scoped memory for tpu_custom_call.1']
    #allocation4 [shape = 's32[1]{0}', space=sflag, size = 0x4, scoped, tag = 'scoped memory for tpu_custom_call.1']
    #allocation5 [shape = 's32[1]{0}', space=sflag, size = 0x4, scoped, tag = 'scoped memory for tpu_custom_call.1']
    #allocation6 [shape = 'u8[8192]{0}', space=vmem, size = 0x2000, scoped, tag = 'input window, operand 1, single buffered']
    #allocation7 [shape = 'u8[8192]{0}', space=vmem, size = 0x2000, scoped, tag = 'output window, operand 0, single buffered']
    %7 = vsyncpa [#allocation5], 0
    %8 = vsyncpa [#allocation3], 0
    %9 = vsyncpa [#allocation4], 0
    // Predicated region
    $region2: #{tpu_custom_call.1} parent=1 // pred_check
      _
    $region3: #{tpu_custom_call.1} parent=1 // pred_check_branch
      %11 = sbr.rel (0) target = $region5
    $region4: #{tpu_custom_call.1} parent=1 // pred_region
      %s13 = ssub.s32 16, 16
      %14 = vsyncadd [#allocation5], %s13
      %17 = dma.hbm_to_smem %s0, 16, [#allocation2], [#allocation5]
    $region5: #{tpu_custom_call.1} parent=1 // pred_fallthru
      _
    // Predicated region
    $region6: #{tpu_custom_call.1} parent=1 // pred_check
      _
    $region7: #{tpu_custom_call.1} parent=1 // pred_check_branch
      %19 = sbr.rel (0) target = $region9
    $region8: #{tpu_custom_call.1} parent=1 // pred_region
      %s21 = ssub.s32 256, 256
      %22 = vsyncadd [#allocation3], %s21
      %s23 = sshll.u32 [#allocation6], 4
      %s24 = int_to_ptr.vmem [resolvable:$true] %s23
      %29 = dma.hbm_to_vmem [thread:$0]  %s1, 256, %s24, [#allocation3], 128, 128, 8
    $region9: #{tpu_custom_call.1} parent=1 // pred_fallthru
      _
    // Predicated region
    $region10: #{tpu_custom_call.1} parent=1 // pred_check
      _
    $region11: #{tpu_custom_call.1} parent=1 // pred_check_branch
      %31 = sbr.rel (0) target = $region13
    $region12: #{tpu_custom_call.1} parent=1 // pred_region
      %32 = dma.done [#allocation5], 16
    $region13: #{tpu_custom_call.1} parent=1 // pred_fallthru
      _
    // Predicated region
    $region14: #{tpu_custom_call.1} parent=1 // pred_check
      _
    $region15: #{tpu_custom_call.1} parent=1 // pred_check_branch
      %34 = sbr.rel (0) target = $region17
    $region16: #{tpu_custom_call.1} parent=1 // pred_region
      %35 = dma.done [#allocation3], 256
    $region17: #{tpu_custom_call.1} parent=1 // pred_fallthru
      _
    %36 = sfence
    %s37 = sld [smem:[#allocation2]]
    %s38 = sld [smem:[#allocation2 + $0x1]]
    %s39 = sld [smem:[#allocation2 + $0x2]]
    %v40 = vld [vmem:[#allocation6] sm:$0xff]
    %v41 = vld [vmem:[#allocation6 + $0x8] sm:$0xff]
    %v42 = vstv %s37
    %v43 = vsub.f32 %v40, %v42
    %v44 = vsub.f32 %v41, %v42
    %v45 = vmul.f32 %v43, %v43
    %v46 = vmul.f32 %v44, %v44
    %v47 = vstv %s38
    %v48 = vmul.f32 %v45, %v47
    %v49 = vmul.f32 %v46, %v47
    %v50 = vstv %s39
    %v51 = vadd.f32 %v48, %v50
    %v52 = vadd.f32 %v49, %v50
    %53 = vst [vmem:[#allocation7] sm:$0xff] %v51
    %54 = vst [vmem:[#allocation7 + $0x8] sm:$0xff] %v52
    // Predicated region
    $region18: #{tpu_custom_call.1} parent=1 // pred_check
      _
    $region19: #{tpu_custom_call.1} parent=1 // pred_check_branch
      %56 = sbr.rel (0) target = $region21
    $region20: #{tpu_custom_call.1} parent=1 // pred_region
      %s58 = ssub.s32 256, 256
      %59 = vsyncadd [#allocation4], %s58
      %s60 = sshll.u32 [#allocation7], 4
      %s61 = int_to_ptr.vmem [resolvable:$true] %s60
      %66 = dma.vmem_to_hbm [thread:$0]  %s61, 256, %s2, [#allocation4], 128, 128, 8
    $region21: #{tpu_custom_call.1} parent=1 // pred_fallthru
      _
    // Predicated region
    $region22: #{tpu_custom_call.1} parent=1 // pred_check
      _
    $region23: #{tpu_custom_call.1} parent=1 // pred_check_branch
      %68 = sbr.rel (0) target = $region25
    $region24: #{tpu_custom_call.1} parent=1 // pred_region
      %69 = dma.done [#allocation4], 256
    $region25: #{tpu_custom_call.1} parent=1 // pred_fallthru
      _
    %70 = vsyncpa [#allocation3], 1
    %71 = vsyncpa [#allocation4], 1
    %72 = vsyncpa [#allocation5], 1

</llo_original>
